<compile_context>
chip_gen: v6e
topology: v6e:2x2x1
jax: 0.10.0
libtpu: 0.0.40
codegen_flags: <defaults>
</compile_context>

<pallas_src>
import functools

import jax
import jax.numpy as jnp
from jax.experimental import pallas as pl
from jax.experimental.pallas import tpu as pltpu


def _round_up(x, m):
    return (x + m - 1) // m * m


def _focal_kernel(x_ref, t_ref, o_ref, *, num_classes, gamma, alpha):
    # x_ref: (tile_n, C) logits; t_ref: (tile_n, 1) int32 targets;
    # o_ref: (1, 1, tile_n) lane-dense per-row loss.
    x = x_ref[...].astype(jnp.float32)                      # (tm, C)
    t = jnp.clip(t_ref[...], 0, num_classes - 1)            # (tm, 1)
    tm, C = x.shape

    classes = jax.lax.broadcasted_iota(jnp.int32, (tm, C), 1)

    if num_classes == 2:
        # 0.95*one_hot(t) + 0.05*one_hot(1-t)  ==  single select on one compare.
        new_target = jnp.where(classes == t, 0.95, 0.05).astype(jnp.float32)
    else:
        t0 = jnp.clip(t - 1, 0, num_classes - 1)
        t1 = jnp.clip(t + 1, 0, num_classes - 1)
        new_target = (jnp.where(classes == t, 0.9, 0.0)
                      + jnp.where(classes == t0, 0.05, 0.0)
                      + jnp.where(classes == t1, 0.05, 0.0)).astype(jnp.float32)

    # log-softmax over the class (lane) axis. exp(shifted) is computed once and
    # reused for both the normalizer and prob (saves a full-tile EUP exp).
    m = jnp.max(x, axis=-1, keepdims=True)
    shifted = x - m
    e = jnp.exp(shifted)
    s = jnp.sum(e, axis=-1, keepdims=True)
    log_prob = shifted - jnp.log(s)
    prob = e * pl.reciprocal(s, approx=True)

    one_minus_p = 1.0 - prob
    g = float(gamma)
    if g == int(g) and 0 <= int(g) <= 8:
        gi = int(g)
        if gi == 0:
            focal = jnp.ones_like(one_minus_p)
        else:
            focal = one_minus_p
            for _ in range(gi - 1):
                focal = focal * one_minus_p          # gamma=2 -> one VALU mul
    else:
        # Non-integer gamma: clamp to avoid NaN from tiny negative rounding.
        focal = jnp.power(jnp.maximum(one_minus_p, 0.0), g)

    contrib = new_target * log_prob * focal                  # (tm, C)

    # Lane-dense row reduction:  out[0, n] = -alpha * sum_c contrib[n, c]
    # done as a tiny matmul (contracting both operands on their class axis),
    # producing a (1, tm) lane-major row directly -- no masked column store.
    w = jnp.full((1, C), -alpha, dtype=jnp.float32)
    row = jax.lax.dot_general(
        w, contrib,
        dimension_numbers=(((1,), (1,)), ((), ())),
        precision=jax.lax.Precision.HIGHEST,
        preferred_element_type=jnp.float32)                  # (1, tm)
    o_ref[...] = row.reshape(1, 1, tm)


def focal_loss(logits, target, *, num_classes, gamma=2.0, alpha=1.0,
               tile_n=1024):
    """Pallas equivalent of FocalLoss(num_classes, gamma, alpha)(logits, target)."""
    N, C = logits.shape
    assert C == num_classes, "last dim of logits must equal num_classes"

    # Effective row tile: multiple of 8, fits VMEM double-buffered on every
    # generation (budget sized for v7x's smaller VMEM), no bigger than needed.
    vmem_budget = 12 * 1024 * 1024          # for the 2x-buffered logits block
    cap = max(8, (vmem_budget // (2 * C * 4)) // 8 * 8)
    tile = min(int(tile_n), cap, _round_up(N, 8))
    tile = max(8, (tile // 8) * 8)

    n_pad = _round_up(N, tile)
    x = logits
    t = target.astype(jnp.int32)
    if n_pad != N:
        x = jnp.pad(x, ((0, n_pad - N), (0, 0)))
        t = jnp.pad(t, (0, n_pad - N))
    t2 = t.reshape(n_pad, 1)
    num_tiles = n_pad // tile

    kernel = functools.partial(
        _focal_kernel, num_classes=num_classes, gamma=gamma, alpha=alpha)

    out = pl.pallas_call(
        kernel,
        out_shape=jax.ShapeDtypeStruct((num_tiles, 1, tile), jnp.float32),
        grid_spec=pltpu.PrefetchScalarGridSpec(
            num_scalar_prefetch=0,
            grid=(num_tiles,),
            in_specs=[
                pl.BlockSpec((tile, C), lambda i: (i, 0)),
                pl.BlockSpec((tile, 1), lambda i: (i, 0)),
            ],
            out_specs=pl.BlockSpec((1, 1, tile), lambda i: (i, 0, 0)),
        ),
        compiler_params=pltpu.CompilerParams(
            dimension_semantics=("parallel",)),
    )(x, t2)

    return out.reshape(n_pad)[:N]


def _focal_loss_ref(logits, target, *, num_classes, gamma=2.0, alpha=1.0):
    """Pure-JAX reference mirroring the PyTorch module."""
    t = jnp.clip(target, 0, num_classes - 1)
    if num_classes == 2:
        new_target = (0.95 * jax.nn.one_hot(t, num_classes)
                      + 0.05 * jax.nn.one_hot(1 - t, num_classes))
    else:
        new_target = 0.9 * jax.nn.one_hot(t, num_classes)
        new_target += 0.05 * jax.nn.one_hot(
            jnp.clip(t - 1, 0, num_classes - 1), num_classes)
        new_target += 0.05 * jax.nn.one_hot(
            jnp.clip(t + 1, 0, num_classes - 1), num_classes)
    log_prob = jax.nn.log_softmax(logits, axis=-1)
    prob = jnp.exp(log_prob)
    loss = -new_target * log_prob * (1 - prob) ** gamma
    return alpha * loss.sum(axis=-1)


if __name__ == "__main__":
    key = jax.random.PRNGKey(0)
    k1, k2, k3, k4, k5, k6 = jax.random.split(key, 6)
    # pl.reciprocal(approx=True) -> slightly looser tolerance than exact f32.
    TOL = dict(atol=3e-3, rtol=3e-3)

    # Multi-class branch (num_classes > 2), single tile.
    N, C = 16, 10
    logits = jax.random.normal(k1, (N, C), dtype=jnp.float32)
    target = jax.random.randint(k2, (N,), 0, C, dtype=jnp.int32)
    out = jax.block_until_ready(focal_loss(logits, target, num_classes=C))
    ref = _focal_loss_ref(logits, target, num_classes=C)
    assert out.shape == (N,)
    assert jnp.allclose(out, ref, **TOL), (out, ref)

    # Same data, forced multi-tile grid (exercises index maps / lane-dense out).
    out_mt = jax.block_until_ready(
        focal_loss(logits, target, num_classes=C, tile_n=8))
    assert jnp.allclose(out_mt, ref, **TOL), (out_mt, ref)

    # Ragged N (exercises the padding path).
    N3 = 13
    logits3 = jax.random.normal(k5, (N3, C), dtype=jnp.float32)
    target3 = jax.random.randint(k6, (N3,), 0, C, dtype=jnp.int32)
    out3 = jax.block_until_ready(focal_loss(logits3, target3, num_classes=C))
    ref3 = _focal_loss_ref(logits3, target3, num_classes=C)
    assert out3.shape == (N3,)
    assert jnp.allclose(out3, ref3, **TOL), (out3, ref3)

    # Binary branch (num_classes == 2).
    N2, C2 = 8, 2
    logits2 = jax.random.normal(k3, (N2, C2), dtype=jnp.float32)
    target2 = jax.random.randint(k4, (N2,), 0, C2, dtype=jnp.int32)
    out2 = jax.block_until_ready(focal_loss(logits2, target2, num_classes=C2))
    ref2 = _focal_loss_ref(logits2, target2, num_classes=C2)
    assert out2.shape == (N2,)
    assert jnp.allclose(out2, ref2, **TOL), (out2, ref2)

    print("KERNEL_OK")
</pallas_src>

<mosaic_0001>
module attributes {stable_mosaic.version = 11 : i64} {
  func.func @_focal_kernel(%arg0: i32, %arg1: memref<16x10xf32, #tpu.memory_space<vmem>>, %arg2: memref<16x1xi32, #tpu.memory_space<vmem>>, %arg3: memref<1x1x16xf32, #tpu.memory_space<vmem>>) attributes {dimension_semantics = [#tpu.dimension_semantics<parallel>], iteration_bounds = array<i64: 1>, scalar_prefetch = 0 : i64, scratch_operands = 0 : i64, tpu.core_type = #tpu.core_type<tc>, window_params = [{transform_indices = @transform_0, window_bounds = array<i64: 16, 10>}, {transform_indices = @transform_1, window_bounds = array<i64: 16, 1>}, {transform_indices = @transform_2, window_bounds = array<i64: 1, 1, 16>}]} {
    %c0 = arith.constant 0 : index
    %c0_0 = arith.constant 0 : index
    %0 = vector.load %arg1[%c0, %c0_0] : memref<16x10xf32, #tpu.memory_space<vmem>>, vector<16x10xf32>
    %c0_1 = arith.constant 0 : index
    %c0_2 = arith.constant 0 : index
    %1 = vector.load %arg2[%c0_1, %c0_2] : memref<16x1xi32, #tpu.memory_space<vmem>>, vector<16x1xi32>
    %c0_i32 = arith.constant 0 : i32
    %c9_i32 = arith.constant 9 : i32
    %2 = vector.broadcast %c0_i32 : i32 to vector<16x1xi32>
    %3 = arith.maxsi %2, %1 : vector<16x1xi32>
    %4 = vector.broadcast %c9_i32 : i32 to vector<16x1xi32>
    %5 = arith.minsi %4, %3 : vector<16x1xi32>
    %6 = tpu.iota {dimensions = array<i32: 1>} : vector<16x10xi32>
    %c1_i32 = arith.constant 1 : i32
    %7 = vector.broadcast %c1_i32 : i32 to vector<16x1xi32>
    %8 = arith.subi %5, %7 : vector<16x1xi32>
    %c0_i32_3 = arith.constant 0 : i32
    %c9_i32_4 = arith.constant 9 : i32
    %9 = vector.broadcast %c0_i32_3 : i32 to vector<16x1xi32>
    %10 = arith.maxsi %9, %8 : vector<16x1xi32>
    %11 = vector.broadcast %c9_i32_4 : i32 to vector<16x1xi32>
    %12 = arith.minsi %11, %10 : vector<16x1xi32>
    %c1_i32_5 = arith.constant 1 : i32
    %13 = vector.broadcast %c1_i32_5 : i32 to vector<16x1xi32>
    %14 = arith.addi %5, %13 : vector<16x1xi32>
    %c0_i32_6 = arith.constant 0 : i32
    %c9_i32_7 = arith.constant 9 : i32
    %15 = vector.broadcast %c0_i32_6 : i32 to vector<16x1xi32>
    %16 = arith.maxsi %15, %14 : vector<16x1xi32>
    %17 = vector.broadcast %c9_i32_7 : i32 to vector<16x1xi32>
    %18 = arith.minsi %17, %16 : vector<16x1xi32>
    %19 = vector.broadcast %5 : vector<16x1xi32> to vector<16x10xi32>
    %20 = arith.cmpi eq, %6, %19 : vector<16x10xi32>
    %cst = arith.constant 0.899999976 : f32
    %cst_8 = arith.constant 0.000000e+00 : f32
    %21 = vector.broadcast %cst : f32 to vector<16x10xf32>
    %22 = vector.broadcast %cst_8 : f32 to vector<16x10xf32>
    %23 = arith.select %20, %21, %22 : vector<16x10xi1>, vector<16x10xf32>
    %24 = vector.broadcast %12 : vector<16x1xi32> to vector<16x10xi32>
    %25 = arith.cmpi eq, %6, %24 : vector<16x10xi32>
    %cst_9 = arith.constant 5.000000e-02 : f32
    %cst_10 = arith.constant 0.000000e+00 : f32
    %26 = vector.broadcast %cst_9 : f32 to vector<16x10xf32>
    %27 = vector.broadcast %cst_10 : f32 to vector<16x10xf32>
    %28 = arith.select %25, %26, %27 : vector<16x10xi1>, vector<16x10xf32>
    %29 = arith.addf %23, %28 : vector<16x10xf32>
    %30 = vector.broadcast %18 : vector<16x1xi32> to vector<16x10xi32>
    %31 = arith.cmpi eq, %6, %30 : vector<16x10xi32>
    %cst_11 = arith.constant 5.000000e-02 : f32
    %cst_12 = arith.constant 0.000000e+00 : f32
    %32 = vector.broadcast %cst_11 : f32 to vector<16x10xf32>
    %33 = vector.broadcast %cst_12 : f32 to vector<16x10xf32>
    %34 = arith.select %31, %32, %33 : vector<16x10xi1>, vector<16x10xf32>
    %35 = arith.addf %29, %34 : vector<16x10xf32>
    %cst_13 = arith.constant dense<0xFF800000> : vector<16xf32>
    %36 = vector.multi_reduction <maximumf>, %0, %cst_13 [1] : vector<16x10xf32> to vector<16xf32>
    %37 = vector.shape_cast %36 : vector<16xf32> to vector<16x1xf32>
    %38 = vector.broadcast %37 : vector<16x1xf32> to vector<16x10xf32>
    %39 = arith.subf %0, %38 : vector<16x10xf32>
    %40 = math.exp %39 : vector<16x10xf32>
    %cst_14 = arith.constant dense<0.000000e+00> : vector<16xf32>
    %41 = vector.multi_reduction <add>, %40, %cst_14 [1] : vector<16x10xf32> to vector<16xf32>
    %42 = vector.shape_cast %41 : vector<16xf32> to vector<16x1xf32>
    %43 = math.log %42 : vector<16x1xf32>
    %44 = vector.broadcast %43 : vector<16x1xf32> to vector<16x10xf32>
    %45 = arith.subf %39, %44 : vector<16x10xf32>
    %46 = tpu.reciprocal %42 {approx = true} : vector<16x1xf32> -> vector<16x1xf32>
    %47 = vector.broadcast %46 : vector<16x1xf32> to vector<16x10xf32>
    %48 = arith.mulf %40, %47 : vector<16x10xf32>
    %cst_15 = arith.constant 1.000000e+00 : f32
    %49 = vector.broadcast %cst_15 : f32 to vector<16x10xf32>
    %50 = arith.subf %49, %48 : vector<16x10xf32>
    %51 = arith.mulf %50, %50 : vector<16x10xf32>
    %52 = arith.mulf %35, %45 : vector<16x10xf32>
    %53 = arith.mulf %52, %51 : vector<16x10xf32>
    %cst_16 = arith.constant -1.000000e+00 : f32
    %54 = vector.broadcast %cst_16 : f32 to vector<1x10xf32>
    %cst_17 = arith.constant dense<0.000000e+00> : vector<1x16xf32>
    %55 = tpu.matmul %54, %53, %cst_17 {dimension_numbers = #tpu.dot_dimension_numbers<[1], [1], [0], [0], [0, 0, 1, 0], [], []>, precision = #tpu.contract_precision<fp32>} : vector<1x10xf32>, vector<16x10xf32>, vector<1x16xf32> -> vector<1x16xf32>
    %56 = vector.shape_cast %55 : vector<1x16xf32> to vector<1x1x16xf32>
    %c0_18 = arith.constant 0 : index
    %c0_19 = arith.constant 0 : index
    %c0_20 = arith.constant 0 : index
    %57 = vector.load %arg3[%c0_18, %c0_19, %c0_20] : memref<1x1x16xf32, #tpu.memory_space<vmem>>, vector<1x1x16xf32>
    tpu.vector_store %arg3[%c0_18, %c0_19, %c0_20], %56 {strides = array<i32>} : memref<1x1x16xf32, #tpu.memory_space<vmem>>, vector<1x1x16xf32>,
    return
  }
  func.func @transform_0(%arg0: i32) -> (i32, i32) {
    %c0_i32 = arith.constant 0 : i32
    %c0_i32_0 = arith.constant 0 : i32
    return %arg0, %c0_i32 : i32, i32
  }
  func.func @transform_1(%arg0: i32) -> (i32, i32) {
    %c0_i32 = arith.constant 0 : i32
    %c0_i32_0 = arith.constant 0 : i32
    return %arg0, %c0_i32 : i32, i32
  }
  func.func @transform_2(%arg0: i32) -> (i32, i32, i32) {
    %c0_i32 = arith.constant 0 : i32
    %c0_i32_0 = arith.constant 0 : i32
    %c0_i32_1 = arith.constant 0 : i32
    return %arg0, %c0_i32, %c0_i32_0 : i32, i32, i32
  }
}

</mosaic_0001>

<llo_original>
// kernel: tpu_custom_call.1
$region0: #{tpu_custom_call.1}
  #allocation0 [shape = 'u32[]', space=smem, size = 0x4, offset = 0x4, fixed_abs, tag = 'smem constant byte address 0x4 - core index']
  #allocation1 [shape = 'u32[144,128]{1,0:T(1,128)}', space=vmem, size = 0x12000, scoped, tag = 'internal scratch']
  %s0 = inlined_call_operand.vmem [shape: f32[16,10], index: 0, kind: input, shape index: {}]
  %s1 = inlined_call_operand.vmem [shape: s32[16,1], index: 1, kind: input, shape index: {}]
  %s2 = inlined_call_operand.hbm [shape: f32[1,1,16], index: 2, kind: output, shape index: {}]
  %s3 = sld [smem:[#allocation0]]
  $region18: #{tpu_custom_call.1} parent=0
    _
  %s5 = ssub.s32 1, %s3
  %s6 = scalar_select 0, %s5, %s3
  $region1: #{tpu_custom_call.1} parent=0
    #allocation2 [shape = 'u8[512]{0}', space=vmem, size = 0x400, scoped, tag = 'output window, operand 0, single buffered']
    #allocation3 [shape = 's32[1]{0}', space=sflag, size = 0x4, scoped, tag = 'scoped memory for tpu_custom_call.1']
    %7 = vsyncpa [#allocation3], 0
    // Predicated region
    $region2: #{tpu_custom_call.1} parent=1 // pred_check
      _
    $region3: #{tpu_custom_call.1} parent=1 // pred_check_branch
      %9 = sbr.rel (0) target = $region5
    $region4: #{tpu_custom_call.1} parent=1 // pred_region
      _
    $region5: #{tpu_custom_call.1} parent=1 // pred_fallthru
      _
    // Predicated region
    $region6: #{tpu_custom_call.1} parent=1 // pred_check
      _
    $region7: #{tpu_custom_call.1} parent=1 // pred_check_branch
      %11 = sbr.rel (0) target = $region9
    $region8: #{tpu_custom_call.1} parent=1 // pred_region
      _
    $region9: #{tpu_custom_call.1} parent=1 // pred_fallthru
      _
    %v12 = vld [vmem:[%s0] sm:$0xff]
    %v13 = vld [vmem:[%s0 + $0x8] sm:$0xff]
    %v14 = vld [vmem:[%s1] sm:$0xff]
    %v15 = vld [vmem:[%s1 + $0x8] sm:$0xff]
    %vm16 = vcmp.gt.s32.totalorder %v14, 0
    %v17 = vsel %vm16, %v14, 0
    %vm18 = vcmp.gt.s32.totalorder %v15, 0
    %v19 = vsel %vm18, %v15, 0
    %vm20 = vcmp.lt.s32.totalorder %v17, 9
    %v21 = vsel %vm20, %v17, 9
    %vm22 = vcmp.lt.s32.totalorder %v19, 9
    %v23 = vsel %vm22, %v19, 9
    %v24 = vlaneseq
    %v25 = vand.u32 %v24, 127
    %v26 = vsub.s32 %v21, 1
    %v27 = vsub.s32 %v23, 1
    %vm28 = vcmp.gt.s32.totalorder %v26, 0
    %v29 = vsel %vm28, %v26, 0
    %vm30 = vcmp.gt.s32.totalorder %v27, 0
    %v31 = vsel %vm30, %v27, 0
    %vm32 = vcmp.lt.s32.totalorder %v29, 9
    %v33 = vsel %vm32, %v29, 9
    %vm34 = vcmp.lt.s32.totalorder %v31, 9
    %v35 = vsel %vm34, %v31, 9
    %v36 = vadd.s32 %v21, 1
    %v37 = vadd.s32 %v23, 1
    %vm38 = vcmp.gt.s32.totalorder %v36, 0
    %v39 = vsel %vm38, %v36, 0
    %vm40 = vcmp.gt.s32.totalorder %v37, 0
    %v41 = vsel %vm40, %v37, 0
    %vm42 = vcmp.lt.s32.totalorder %v39, 9
    %v43 = vsel %vm42, %v39, 9
    %vm44 = vcmp.lt.s32.totalorder %v41, 9
    %v45 = vsel %vm44, %v41, 9
    %46 = vset.pattern.permute.xlu0 0
    %47 = vperm.xlu0 %46, %v21
    %v48 = vpop.permute.xlu0 %47
    %49 = vset.pattern.permute.xlu0 0
    %50 = vperm.xlu0 %49, %v23
    %v51 = vpop.permute.xlu0 %50
    %vm52 = vcmp.eq.s32.totalorder %v25, %v48
    %vm53 = vcmp.eq.s32.totalorder %v25, %v51
    %v54 = vsel %vm52, 0.9, 0.0
    %v55 = vsel %vm53, 0.9, 0.0
    %56 = vset.pattern.permute.xlu0 0
    %57 = vperm.xlu0 %56, %v33
    %v58 = vpop.permute.xlu0 %57
    %59 = vset.pattern.permute.xlu0 0
    %60 = vperm.xlu0 %59, %v35
    %v61 = vpop.permute.xlu0 %60
    %vm62 = vcmp.eq.s32.totalorder %v25, %v58
    %vm63 = vcmp.eq.s32.totalorder %v25, %v61
    %v64 = vsel %vm62, 0.05, 0.0
    %v65 = vsel %vm63, 0.05, 0.0
    %v66 = vadd.f32 %v54, %v64
    %v67 = vadd.f32 %v55, %v65
    %68 = vset.pattern.permute.xlu0 0
    %69 = vperm.xlu0 %68, %v43
    %v70 = vpop.permute.xlu0 %69
    %71 = vset.pattern.permute.xlu0 0
    %72 = vperm.xlu0 %71, %v45
    %v73 = vpop.permute.xlu0 %72
    %vm74 = vcmp.eq.s32.totalorder %v25, %v70
    %vm75 = vcmp.eq.s32.totalorder %v25, %v73
    %v76 = vsel %vm74, 0.05, 0.0
    %v77 = vsel %vm75, 0.05, 0.0
    %v78 = vadd.f32 %v66, %v76
    %v79 = vadd.f32 %v67, %v77
    %vm80 = vcmask 80896
    %v81 = vsel %vm80, %v12, -inf
    %82 = vmax.xlane.f32.xlu0 %v81
    %v83 = vpop.xlane.xlu0 %82
    %v84 = vsel %vm80, %v13, -inf
    %85 = vmax.xlane.f32.xlu0 %v84
    %v86 = vpop.xlane.xlu0 %85
    %v87 = vsub.f32 %v12, %v83
    %v88 = vsub.f32 %v13, %v86
    %v89 = vmul.f32 %v87, 1.442695
    %v90 = vpow.pop %v89
    %v91 = vmul.f32 %v88, 1.442695
    %v92 = vpow.pop %v91
    %v93 = vsel %vm80, %v90, 0.0
    %94 = vadd.xlane.f32.xlu0 %v93
    %v95 = vpop.xlane.xlu0 %94
    %v96 = vsel %vm80, %v92, 0.0
    %97 = vadd.xlane.f32.xlu0 %v96
    %v98 = vpop.xlane.xlu0 %97
    %v99 = vlog2.pop %v95
    %v100 = vmul.f32 %v99, 0.6931472
    %v101 = vlog2.pop %v98
    %v102 = vmul.f32 %v101, 0.6931472
    %v103 = vsub.f32 %v87, %v100
    %v104 = vsub.f32 %v88, %v102
    %v105 = vrcp.pop %v95
    %v106 = vrcp.pop %v98
    %v107 = vmul.f32 %v90, %v105
    %v108 = vmul.f32 %v92, %v106
    %v109 = vsub.f32 1.0, %v107
    %v110 = vsub.f32 1.0, %v108
    %v111 = vmul.f32 %v109, %v109
    %v112 = vmul.f32 %v110, %v110
    %v113 = vmul.f32 %v78, %v103
    %v114 = vmul.f32 %v79, %v104
    %v115 = vmul.f32 %v113, %v111
    %v116 = vmul.f32 %v114, %v112
    %v118 = vsel %vm80, -1.0, 0
    %v121 = vsel %vm80, %v115, 0
    %v124 = vsel %vm80, %v116, 0
    %126 = vmatprep.subr.mxu0 0.0
    %127 = vmatpush1.xpose.msra.mxu0 0.0
    %128 = vmatprep.subr.mxu0 0.0
    %129 = vmatpush1.xpose.msra.mxu0 0.0
    %130 = vmatprep.subr.mxu0 0.0
    %131 = vmatpush1.xpose.msra.mxu0 0.0
    %132 = vmatprep.subr.mxu0 0.0
    %133 = vmatpush1.xpose.msra.mxu0 0.0
    %134 = vmatprep.subr.mxu0 0.0
    %135 = vmatpush1.xpose.msra.mxu0 0.0
    %136 = vmatprep.subr.mxu0 0.0
    %137 = vmatpush1.xpose.msra.mxu0 0.0
    %138 = vmatprep.subr.mxu0 0.0
    %139 = vmatpush1.xpose.msra.mxu0 0.0
    %140 = vmatprep.subr.mxu0 0.0
    %141 = vmatpush1.xpose.msra.mxu0 0.0
    %142 = vmatprep.subr.mxu0 0.0
    %143 = vmatpush1.xpose.msra.mxu0 0.0
    %144 = vmatprep.subr.mxu0 0.0
    %145 = vmatpush1.xpose.msra.mxu0 0.0
    %146 = vmatprep.subr.mxu0 0.0
    %147 = vmatpush1.xpose.msra.mxu0 0.0
    %148 = vmatprep.subr.mxu0 0.0
    %149 = vmatpush1.xpose.msra.mxu0 0.0
    %150 = vmatprep.subr.mxu0 0.0
    %151 = vmatpush1.xpose.msra.mxu0 0.0
    %152 = vmatprep.subr.mxu0 0.0
    %153 = vmatpush1.xpose.msra.mxu0 0.0
    %154 = vmatprep.subr.mxu0 0.0
    %v155 = vand.u32 %v124, 4294901760
    %156 = vmatpush1.xpose.msra.mxu0 %v155
    %157 = vmatprep.subr.mxu0 0.0
    %v158 = vand.u32 %v121, 4294901760
    %159 = vmatpush1.xpose.msra.mxu0 %v158
    %160 = vmatprep.subr.mxu0 0.0
    %161 = vmatpush2.xpose.msra.mxu0 0.0
    %162 = vmatprep.subr.mxu0 0.0
    %163 = vmatpush2.xpose.msra.mxu0 0.0
    %164 = vmatprep.subr.mxu0 0.0
    %165 = vmatpush2.xpose.msra.mxu0 0.0
    %166 = vmatprep.subr.mxu0 0.0
    %167 = vmatpush2.xpose.msra.mxu0 0.0
    %168 = vmatprep.subr.mxu0 0.0
    %169 = vmatpush2.xpose.msra.mxu0 0.0
    %170 = vmatprep.subr.mxu0 0.0
    %171 = vmatpush2.xpose.msra.mxu0 0.0
    %172 = vmatprep.subr.mxu0 0.0
    %173 = vmatpush2.xpose.msra.mxu0 0.0
    %174 = vmatprep.subr.mxu0 0.0
    %175 = vmatpush2.xpose.msra.mxu0 0.0
    %176 = vmatprep.subr.mxu0 0.0
    %177 = vmatpush2.xpose.msra.mxu0 0.0
    %178 = vmatprep.subr.mxu0 0.0
    %179 = vmatpush2.xpose.msra.mxu0 0.0
    %180 = vmatprep.subr.mxu0 0.0
    %181 = vmatpush2.xpose.msra.mxu0 0.0
    %182 = vmatprep.subr.mxu0 0.0
    %183 = vmatpush2.xpose.msra.mxu0 0.0
    %184 = vmatprep.subr.mxu0 0.0
    %185 = vmatpush2.xpose.msra.mxu0 0.0
    %186 = vmatprep.subr.mxu0 0.0
    %187 = vmatpush2.xpose.msra.mxu0 0.0
    %188 = vmatprep.subr.mxu0 0.0
    %189 = vmatpush2.xpose.msra.mxu0 0.0
    %190 = vmatprep.subr.mxu0 0.0
    %191 = vmatpush2.xpose.msra.mxu0 0.0
    %192 = vmatprep.mubr.f32.mxu0 0.0
    %v193 = vand.u32 %v118, 4294901760
    %v194 = vsub.f32 %v118, %v193
    %v195 = vand.u32 %v194, 4294901760
    %v196 = vsub.f32 %v194, %v195
    %v197 = vand.u32 %v196, 4294901760
    %198 = vmatmul.mubr.f32.gmra.mxu0 %v197
    %v199 = vpop.f32.mrf.mxu0
    %v200 = vadd.f32 0.0, %v199
    %v201 = vpop.f32.mrf.mxu0
    %202 = vdwg.mxu0
    %203 = vmatprep.subr.mxu0 0.0
    %204 = vmatpush1.xpose.msra.mxu0 0.0
    %205 = vmatprep.subr.mxu0 0.0
    %206 = vmatpush1.xpose.msra.mxu0 0.0
    %207 = vmatprep.subr.mxu0 0.0
    %208 = vmatpush1.xpose.msra.mxu0 0.0
    %209 = vmatprep.subr.mxu0 0.0
    %210 = vmatpush1.xpose.msra.mxu0 0.0
    %211 = vmatprep.subr.mxu0 0.0
    %212 = vmatpush1.xpose.msra.mxu0 0.0
    %213 = vmatprep.subr.mxu0 0.0
    %214 = vmatpush1.xpose.msra.mxu0 0.0
    %215 = vmatprep.subr.mxu0 0.0
    %216 = vmatpush1.xpose.msra.mxu0 0.0
    %217 = vmatprep.subr.mxu0 0.0
    %218 = vmatpush1.xpose.msra.mxu0 0.0
    %219 = vmatprep.subr.mxu0 0.0
    %220 = vmatpush1.xpose.msra.mxu0 0.0
    %221 = vmatprep.subr.mxu0 0.0
    %222 = vmatpush1.xpose.msra.mxu0 0.0
    %223 = vmatprep.subr.mxu0 0.0
    %224 = vmatpush1.xpose.msra.mxu0 0.0
    %225 = vmatprep.subr.mxu0 0.0
    %226 = vmatpush1.xpose.msra.mxu0 0.0
    %227 = vmatprep.subr.mxu0 0.0
    %228 = vmatpush1.xpose.msra.mxu0 0.0
    %229 = vmatprep.subr.mxu0 0.0
    %230 = vmatpush1.xpose.msra.mxu0 0.0
    %231 = vmatprep.subr.mxu0 0.0
    %v232 = vand.u32 %v124, 4294901760
    %v233 = vsub.f32 %v124, %v232
    %v234 = vand.u32 %v233, 4294901760
    %v235 = vsub.f32 %v233, %v234
    %v236 = vand.u32 %v235, 4294901760
    %237 = vmatpush1.xpose.msra.mxu0 %v236
    %238 = vmatprep.subr.mxu0 0.0
    %v239 = vand.u32 %v121, 4294901760
    %v240 = vsub.f32 %v121, %v239
    %v241 = vand.u32 %v240, 4294901760
    %v242 = vsub.f32 %v240, %v241
    %v243 = vand.u32 %v242, 4294901760
    %244 = vmatpush1.xpose.msra.mxu0 %v243
    %245 = vmatprep.subr.mxu0 0.0
    %246 = vmatpush2.xpose.msra.mxu0 0.0
    %247 = vmatprep.subr.mxu0 0.0
    %248 = vmatpush2.xpose.msra.mxu0 0.0
    %249 = vmatprep.subr.mxu0 0.0
    %250 = vmatpush2.xpose.msra.mxu0 0.0
    %251 = vmatprep.subr.mxu0 0.0
    %252 = vmatpush2.xpose.msra.mxu0 0.0
    %253 = vmatprep.subr.mxu0 0.0
    %254 = vmatpush2.xpose.msra.mxu0 0.0
    %255 = vmatprep.subr.mxu0 0.0
    %256 = vmatpush2.xpose.msra.mxu0 0.0
    %257 = vmatprep.subr.mxu0 0.0
    %258 = vmatpush2.xpose.msra.mxu0 0.0
    %259 = vmatprep.subr.mxu0 0.0
    %260 = vmatpush2.xpose.msra.mxu0 0.0
    %261 = vmatprep.subr.mxu0 0.0
    %262 = vmatpush2.xpose.msra.mxu0 0.0
    %263 = vmatprep.subr.mxu0 0.0
    %264 = vmatpush2.xpose.msra.mxu0 0.0
    %265 = vmatprep.subr.mxu0 0.0
    %266 = vmatpush2.xpose.msra.mxu0 0.0
    %267 = vmatprep.subr.mxu0 0.0
    %268 = vmatpush2.xpose.msra.mxu0 0.0
    %269 = vmatprep.subr.mxu0 0.0
    %270 = vmatpush2.xpose.msra.mxu0 0.0
    %271 = vmatprep.subr.mxu0 0.0
    %272 = vmatpush2.xpose.msra.mxu0 0.0
    %273 = vmatprep.subr.mxu0 0.0
    %274 = vmatpush2.xpose.msra.mxu0 0.0
    %275 = vmatprep.subr.mxu0 0.0
    %276 = vmatpush2.xpose.msra.mxu0 0.0
    %277 = vmatprep.mubr.f32.mxu0 0.0
    %v278 = vand.u32 %v118, 4294901760
    %279 = vmatmul.mubr.f32.gmra.mxu0 %v278
    %v280 = vpop.f32.mrf.mxu0
    %v281 = vadd.f32 %v200, %v280
    %v282 = vpop.f32.mrf.mxu0
    %283 = vdwg.mxu0
    %284 = vmatprep.subr.mxu0 0.0
    %285 = vmatpush1.xpose.msra.mxu0 0.0
    %286 = vmatprep.subr.mxu0 0.0
    %287 = vmatpush1.xpose.msra.mxu0 0.0
    %288 = vmatprep.subr.mxu0 0.0
    %289 = vmatpush1.xpose.msra.mxu0 0.0
    %290 = vmatprep.subr.mxu0 0.0
    %291 = vmatpush1.xpose.msra.mxu0 0.0
    %292 = vmatprep.subr.mxu0 0.0
    %293 = vmatpush1.xpose.msra.mxu0 0.0
    %294 = vmatprep.subr.mxu0 0.0
    %295 = vmatpush1.xpose.msra.mxu0 0.0
    %296 = vmatprep.subr.mxu0 0.0
    %297 = vmatpush1.xpose.msra.mxu0 0.0
    %298 = vmatprep.subr.mxu0 0.0
    %299 = vmatpush1.xpose.msra.mxu0 0.0
    %300 = vmatprep.subr.mxu0 0.0
    %301 = vmatpush1.xpose.msra.mxu0 0.0
    %302 = vmatprep.subr.mxu0 0.0
    %303 = vmatpush1.xpose.msra.mxu0 0.0
    %304 = vmatprep.subr.mxu0 0.0
    %305 = vmatpush1.xpose.msra.mxu0 0.0
    %306 = vmatprep.subr.mxu0 0.0
    %307 = vmatpush1.xpose.msra.mxu0 0.0
    %308 = vmatprep.subr.mxu0 0.0
    %309 = vmatpush1.xpose.msra.mxu0 0.0
    %310 = vmatprep.subr.mxu0 0.0
    %311 = vmatpush1.xpose.msra.mxu0 0.0
    %312 = vmatprep.subr.mxu0 0.0
    %v313 = vand.u32 %v124, 4294901760
    %v314 = vsub.f32 %v124, %v313
    %315 = vmatpush1.xpose.msra.mxu0 %v314
    %316 = vmatprep.subr.mxu0 0.0
    %v317 = vand.u32 %v121, 4294901760
    %v318 = vsub.f32 %v121, %v317
    %319 = vmatpush1.xpose.msra.mxu0 %v318
    %320 = vmatprep.subr.mxu0 0.0
    %321 = vmatpush2.xpose.msra.mxu0 0.0
    %322 = vmatprep.subr.mxu0 0.0
    %323 = vmatpush2.xpose.msra.mxu0 0.0
    %324 = vmatprep.subr.mxu0 0.0
    %325 = vmatpush2.xpose.msra.mxu0 0.0
    %326 = vmatprep.subr.mxu0 0.0
    %327 = vmatpush2.xpose.msra.mxu0 0.0
    %328 = vmatprep.subr.mxu0 0.0
    %329 = vmatpush2.xpose.msra.mxu0 0.0
    %330 = vmatprep.subr.mxu0 0.0
    %331 = vmatpush2.xpose.msra.mxu0 0.0
    %332 = vmatprep.subr.mxu0 0.0
    %333 = vmatpush2.xpose.msra.mxu0 0.0
    %334 = vmatprep.subr.mxu0 0.0
    %335 = vmatpush2.xpose.msra.mxu0 0.0
    %336 = vmatprep.subr.mxu0 0.0
    %337 = vmatpush2.xpose.msra.mxu0 0.0
    %338 = vmatprep.subr.mxu0 0.0
    %339 = vmatpush2.xpose.msra.mxu0 0.0
    %340 = vmatprep.subr.mxu0 0.0
    %341 = vmatpush2.xpose.msra.mxu0 0.0
    %342 = vmatprep.subr.mxu0 0.0
    %343 = vmatpush2.xpose.msra.mxu0 0.0
    %344 = vmatprep.subr.mxu0 0.0
    %345 = vmatpush2.xpose.msra.mxu0 0.0
    %346 = vmatprep.subr.mxu0 0.0
    %347 = vmatpush2.xpose.msra.mxu0 0.0
    %348 = vmatprep.subr.mxu0 0.0
    %349 = vmatpush2.xpose.msra.mxu0 0.0
    %350 = vmatprep.subr.mxu0 0.0
    %351 = vmatpush2.xpose.msra.mxu0 0.0
    %352 = vmatprep.mubr.f32.mxu0 0.0
    %v353 = vand.u32 %v118, 4294901760
    %v354 = vsub.f32 %v118, %v353
    %355 = vmatmul.mubr.f32.gmra.mxu0 %v354
    %v356 = vpop.f32.mrf.mxu0
    %v357 = vadd.f32 %v281, %v356
    %v358 = vpop.f32.mrf.mxu0
    %359 = vdwg.mxu0
    %360 = vmatprep.subr.mxu0 0.0
    %361 = vmatpush1.xpose.msra.mxu0 0.0
    %362 = vmatprep.subr.mxu0 0.0
    %363 = vmatpush1.xpose.msra.mxu0 0.0
    %364 = vmatprep.subr.mxu0 0.0
    %365 = vmatpush1.xpose.msra.mxu0 0.0
    %366 = vmatprep.subr.mxu0 0.0
    %367 = vmatpush1.xpose.msra.mxu0 0.0
    %368 = vmatprep.subr.mxu0 0.0
    %369 = vmatpush1.xpose.msra.mxu0 0.0
    %370 = vmatprep.subr.mxu0 0.0
    %371 = vmatpush1.xpose.msra.mxu0 0.0
    %372 = vmatprep.subr.mxu0 0.0
    %373 = vmatpush1.xpose.msra.mxu0 0.0
    %374 = vmatprep.subr.mxu0 0.0
    %375 = vmatpush1.xpose.msra.mxu0 0.0
    %376 = vmatprep.subr.mxu0 0.0
    %377 = vmatpush1.xpose.msra.mxu0 0.0
    %378 = vmatprep.subr.mxu0 0.0
    %379 = vmatpush1.xpose.msra.mxu0 0.0
    %380 = vmatprep.subr.mxu0 0.0
    %381 = vmatpush1.xpose.msra.mxu0 0.0
    %382 = vmatprep.subr.mxu0 0.0
    %383 = vmatpush1.xpose.msra.mxu0 0.0
    %384 = vmatprep.subr.mxu0 0.0
    %385 = vmatpush1.xpose.msra.mxu0 0.0
    %386 = vmatprep.subr.mxu0 0.0
    %387 = vmatpush1.xpose.msra.mxu0 0.0
    %388 = vmatprep.subr.mxu0 0.0
    %v389 = vand.u32 %v124, 4294901760
    %390 = vmatpush1.xpose.msra.mxu0 %v389
    %391 = vmatprep.subr.mxu0 0.0
    %v392 = vand.u32 %v121, 4294901760
    %393 = vmatpush1.xpose.msra.mxu0 %v392
    %394 = vmatprep.subr.mxu0 0.0
    %395 = vmatpush2.xpose.msra.mxu0 0.0
    %396 = vmatprep.subr.mxu0 0.0
    %397 = vmatpush2.xpose.msra.mxu0 0.0
    %398 = vmatprep.subr.mxu0 0.0
    %399 = vmatpush2.xpose.msra.mxu0 0.0
    %400 = vmatprep.subr.mxu0 0.0
    %401 = vmatpush2.xpose.msra.mxu0 0.0
    %402 = vmatprep.subr.mxu0 0.0
    %403 = vmatpush2.xpose.msra.mxu0 0.0
    %404 = vmatprep.subr.mxu0 0.0
    %405 = vmatpush2.xpose.msra.mxu0 0.0
    %406 = vmatprep.subr.mxu0 0.0
    %407 = vmatpush2.xpose.msra.mxu0 0.0
    %408 = vmatprep.subr.mxu0 0.0
    %409 = vmatpush2.xpose.msra.mxu0 0.0
    %410 = vmatprep.subr.mxu0 0.0
    %411 = vmatpush2.xpose.msra.mxu0 0.0
    %412 = vmatprep.subr.mxu0 0.0
    %413 = vmatpush2.xpose.msra.mxu0 0.0
    %414 = vmatprep.subr.mxu0 0.0
    %415 = vmatpush2.xpose.msra.mxu0 0.0
    %416 = vmatprep.subr.mxu0 0.0
    %417 = vmatpush2.xpose.msra.mxu0 0.0
    %418 = vmatprep.subr.mxu0 0.0
    %419 = vmatpush2.xpose.msra.mxu0 0.0
    %420 = vmatprep.subr.mxu0 0.0
    %421 = vmatpush2.xpose.msra.mxu0 0.0
    %422 = vmatprep.subr.mxu0 0.0
    %423 = vmatpush2.xpose.msra.mxu0 0.0
    %424 = vmatprep.subr.mxu0 0.0
    %425 = vmatpush2.xpose.msra.mxu0 0.0
    %426 = vmatprep.mubr.f32.mxu0 0.0
    %v427 = vand.u32 %v118, 4294901760
    %v428 = vsub.f32 %v118, %v427
    %v429 = vand.u32 %v428, 4294901760
    %430 = vmatmul.mubr.f32.gmra.mxu0 %v429
    %v431 = vpop.f32.mrf.mxu0
    %v432 = vadd.f32 %v357, %v431
    %v433 = vpop.f32.mrf.mxu0
    %434 = vdwg.mxu0
    %435 = vmatprep.subr.mxu0 0.0
    %436 = vmatpush1.xpose.msra.mxu0 0.0
    %437 = vmatprep.subr.mxu0 0.0
    %438 = vmatpush1.xpose.msra.mxu0 0.0
    %439 = vmatprep.subr.mxu0 0.0
    %440 = vmatpush1.xpose.msra.mxu0 0.0
    %441 = vmatprep.subr.mxu0 0.0
    %442 = vmatpush1.xpose.msra.mxu0 0.0
    %443 = vmatprep.subr.mxu0 0.0
    %444 = vmatpush1.xpose.msra.mxu0 0.0
    %445 = vmatprep.subr.mxu0 0.0
    %446 = vmatpush1.xpose.msra.mxu0 0.0
    %447 = vmatprep.subr.mxu0 0.0
    %448 = vmatpush1.xpose.msra.mxu0 0.0
    %449 = vmatprep.subr.mxu0 0.0
    %450 = vmatpush1.xpose.msra.mxu0 0.0
    %451 = vmatprep.subr.mxu0 0.0
    %452 = vmatpush1.xpose.msra.mxu0 0.0
    %453 = vmatprep.subr.mxu0 0.0
    %454 = vmatpush1.xpose.msra.mxu0 0.0
    %455 = vmatprep.subr.mxu0 0.0
    %456 = vmatpush1.xpose.msra.mxu0 0.0
    %457 = vmatprep.subr.mxu0 0.0
    %458 = vmatpush1.xpose.msra.mxu0 0.0
    %459 = vmatprep.subr.mxu0 0.0
    %460 = vmatpush1.xpose.msra.mxu0 0.0
    %461 = vmatprep.subr.mxu0 0.0
    %462 = vmatpush1.xpose.msra.mxu0 0.0
    %463 = vmatprep.subr.mxu0 0.0
    %v464 = vand.u32 %v124, 4294901760
    %v465 = vsub.f32 %v124, %v464
    %v466 = vand.u32 %v465, 4294901760
    %467 = vmatpush1.xpose.msra.mxu0 %v466
    %468 = vmatprep.subr.mxu0 0.0
    %v469 = vand.u32 %v121, 4294901760
    %v470 = vsub.f32 %v121, %v469
    %v471 = vand.u32 %v470, 4294901760
    %472 = vmatpush1.xpose.msra.mxu0 %v471
    %473 = vmatprep.subr.mxu0 0.0
    %474 = vmatpush2.xpose.msra.mxu0 0.0
    %475 = vmatprep.subr.mxu0 0.0
    %476 = vmatpush2.xpose.msra.mxu0 0.0
    %477 = vmatprep.subr.mxu0 0.0
    %478 = vmatpush2.xpose.msra.mxu0 0.0
    %479 = vmatprep.subr.mxu0 0.0
    %480 = vmatpush2.xpose.msra.mxu0 0.0
    %481 = vmatprep.subr.mxu0 0.0
    %482 = vmatpush2.xpose.msra.mxu0 0.0
    %483 = vmatprep.subr.mxu0 0.0
    %484 = vmatpush2.xpose.msra.mxu0 0.0
    %485 = vmatprep.subr.mxu0 0.0
    %486 = vmatpush2.xpose.msra.mxu0 0.0
    %487 = vmatprep.subr.mxu0 0.0
    %488 = vmatpush2.xpose.msra.mxu0 0.0
    %489 = vmatprep.subr.mxu0 0.0
    %490 = vmatpush2.xpose.msra.mxu0 0.0
    %491 = vmatprep.subr.mxu0 0.0
    %492 = vmatpush2.xpose.msra.mxu0 0.0
    %493 = vmatprep.subr.mxu0 0.0
    %494 = vmatpush2.xpose.msra.mxu0 0.0
    %495 = vmatprep.subr.mxu0 0.0
    %496 = vmatpush2.xpose.msra.mxu0 0.0
    %497 = vmatprep.subr.mxu0 0.0
    %498 = vmatpush2.xpose.msra.mxu0 0.0
    %499 = vmatprep.subr.mxu0 0.0
    %500 = vmatpush2.xpose.msra.mxu0 0.0
    %501 = vmatprep.subr.mxu0 0.0
    %502 = vmatpush2.xpose.msra.mxu0 0.0
    %503 = vmatprep.subr.mxu0 0.0
    %504 = vmatpush2.xpose.msra.mxu0 0.0
    %505 = vmatprep.mubr.f32.mxu0 0.0
    %v506 = vand.u32 %v118, 4294901760
    %507 = vmatmul.mubr.f32.gmra.mxu0 %v506
    %v508 = vpop.f32.mrf.mxu0
    %v509 = vadd.f32 %v432, %v508
    %v510 = vpop.f32.mrf.mxu0
    %511 = vdwg.mxu0
    %512 = vmatprep.subr.mxu0 0.0
    %513 = vmatpush1.xpose.msra.mxu0 0.0
    %514 = vmatprep.subr.mxu0 0.0
    %515 = vmatpush1.xpose.msra.mxu0 0.0
    %516 = vmatprep.subr.mxu0 0.0
    %517 = vmatpush1.xpose.msra.mxu0 0.0
    %518 = vmatprep.subr.mxu0 0.0
    %519 = vmatpush1.xpose.msra.mxu0 0.0
    %520 = vmatprep.subr.mxu0 0.0
    %521 = vmatpush1.xpose.msra.mxu0 0.0
    %522 = vmatprep.subr.mxu0 0.0
    %523 = vmatpush1.xpose.msra.mxu0 0.0
    %524 = vmatprep.subr.mxu0 0.0
    %525 = vmatpush1.xpose.msra.mxu0 0.0
    %526 = vmatprep.subr.mxu0 0.0
    %527 = vmatpush1.xpose.msra.mxu0 0.0
    %528 = vmatprep.subr.mxu0 0.0
    %529 = vmatpush1.xpose.msra.mxu0 0.0
    %530 = vmatprep.subr.mxu0 0.0
    %531 = vmatpush1.xpose.msra.mxu0 0.0
    %532 = vmatprep.subr.mxu0 0.0
    %533 = vmatpush1.xpose.msra.mxu0 0.0
    %534 = vmatprep.subr.mxu0 0.0
    %535 = vmatpush1.xpose.msra.mxu0 0.0
    %536 = vmatprep.subr.mxu0 0.0
    %537 = vmatpush1.xpose.msra.mxu0 0.0
    %538 = vmatprep.subr.mxu0 0.0
    %539 = vmatpush1.xpose.msra.mxu0 0.0
    %540 = vmatprep.subr.mxu0 0.0
    %v541 = vand.u32 %v124, 4294901760
    %542 = vmatpush1.xpose.msra.mxu0 %v541
    %543 = vmatprep.subr.mxu0 0.0
    %v544 = vand.u32 %v121, 4294901760
    %545 = vmatpush1.xpose.msra.mxu0 %v544
    %546 = vmatprep.subr.mxu0 0.0
    %547 = vmatpush2.xpose.msra.mxu0 0.0
    %548 = vmatprep.subr.mxu0 0.0
    %549 = vmatpush2.xpose.msra.mxu0 0.0
    %550 = vmatprep.subr.mxu0 0.0
    %551 = vmatpush2.xpose.msra.mxu0 0.0
    %552 = vmatprep.subr.mxu0 0.0
    %553 = vmatpush2.xpose.msra.mxu0 0.0
    %554 = vmatprep.subr.mxu0 0.0
    %555 = vmatpush2.xpose.msra.mxu0 0.0
    %556 = vmatprep.subr.mxu0 0.0
    %557 = vmatpush2.xpose.msra.mxu0 0.0
    %558 = vmatprep.subr.mxu0 0.0
    %559 = vmatpush2.xpose.msra.mxu0 0.0
    %560 = vmatprep.subr.mxu0 0.0
    %561 = vmatpush2.xpose.msra.mxu0 0.0
    %562 = vmatprep.subr.mxu0 0.0
    %563 = vmatpush2.xpose.msra.mxu0 0.0
    %564 = vmatprep.subr.mxu0 0.0
    %565 = vmatpush2.xpose.msra.mxu0 0.0
    %566 = vmatprep.subr.mxu0 0.0
    %567 = vmatpush2.xpose.msra.mxu0 0.0
    %568 = vmatprep.subr.mxu0 0.0
    %569 = vmatpush2.xpose.msra.mxu0 0.0
    %570 = vmatprep.subr.mxu0 0.0
    %571 = vmatpush2.xpose.msra.mxu0 0.0
    %572 = vmatprep.subr.mxu0 0.0
    %573 = vmatpush2.xpose.msra.mxu0 0.0
    %574 = vmatprep.subr.mxu0 0.0
    %575 = vmatpush2.xpose.msra.mxu0 0.0
    %576 = vmatprep.subr.mxu0 0.0
    %577 = vmatpush2.xpose.msra.mxu0 0.0
    %578 = vmatprep.mubr.f32.mxu0 0.0
    %v579 = vand.u32 %v118, 4294901760
    %580 = vmatmul.mubr.f32.gmra.mxu0 %v579
    %v581 = vpop.f32.mrf.mxu0
    %v582 = vadd.f32 %v509, %v581
    %v583 = vpop.f32.mrf.mxu0
    %584 = vdwg.mxu0
    %vm585 = vcmask 122880
    %586 = vst.msk [vmem:[#allocation2] sm:$0x1] %vm585, %v582
    // Predicated region
    $region10: #{tpu_custom_call.1} parent=1 // pred_check
      _
    $region11: #{tpu_custom_call.1} parent=1 // pred_check_branch
      %588 = sbr.rel (0) target = $region13
    $region12: #{tpu_custom_call.1} parent=1 // pred_region
      %s590 = ssub.s32 16, 16
      %591 = vsyncadd [#allocation3], %s590
      %s593 = sshll.u32 [#allocation2], 4
      %s594 = int_to_ptr.vmem [resolvable:$true] %s593
      %596 = dma.vmem_to_hbm [thread:$0]  %s594, 16, %s2, [#allocation3]
    $region13: #{tpu_custom_call.1} parent=1 // pred_fallthru
      _
    // Predicated region
    $region14: #{tpu_custom_call.1} parent=1 // pred_check
      _
    $region15: #{tpu_custom_call.1} parent=1 // pred_check_branch
      %598 = sbr.rel (0) target = $region17
    $region16: #{tpu_custom_call.1} parent=1 // pred_region
      %599 = dma.done [#allocation3], 16
    $region17: #{tpu_custom_call.1} parent=1 // pred_fallthru
      _
    %600 = vsyncpa [#allocation3], 1

</llo_original>
